<compile_context>
chip_gen: v7x
topology: tpu7x:2x2x1
jax: 0.10.0
libtpu: 0.0.40
codegen_flags: <defaults>
</compile_context>

<pallas_src>
import math

import jax
import jax.numpy as jnp
from jax.experimental import pallas as pl
from jax.experimental.pallas import tpu as pltpu

_LANE = 128
# ~4 MiB (padded) per x block: >=85% of the measured HBM-roofline tiling curve while
# keeping double-buffered x/out/pe comfortably inside v7x's 64 MiB VMEM.
_TARGET_BLOCK_BYTES = 4 * 1024 * 1024


def _cdiv(a, b):
    return -(-a // b)


def _round_up(a, b):
    return _cdiv(a, b) * b


def _sublanes(itemsize):
    # VMEM tiles are (8,128) x 32-bit; sub-32-bit dtypes pack along sublanes.
    return max(8, 32 // itemsize)


def _vmem_limit(bytes_needed):
    # Real padded footprint + 2 MiB headroom, floored at 16 MiB, capped at 48 MiB
    # (safe on v5e/v6e 128 MiB and v7x 64 MiB physical VMEM).
    return int(min(max(bytes_needed + (2 << 20), 16 << 20), 48 << 20))


def make_positional_encoding(d_model: int, max_len: int = 5000) -> jnp.ndarray:
    """Sinusoidal PE table, shape (max_len, d_model), float32 (same math as the module)."""
    assert d_model % 2 == 0, "PositionalEncoding requires an even d_model"
    position = jnp.arange(0, max_len, dtype=jnp.float32)[:, None]            # (max_len, 1)
    div_term = jnp.exp(
        jnp.arange(0, d_model, 2, dtype=jnp.float32) * (-math.log(10000.0) / d_model)
    )                                                                         # (d_model/2,)
    angles = position * div_term                                              # (max_len, d/2)
    pe = jnp.zeros((max_len, d_model), dtype=jnp.float32)
    pe = pe.at[:, 0::2].set(jnp.sin(angles))
    pe = pe.at[:, 1::2].set(jnp.cos(angles))
    return pe


def _add_pe_kernel(x_ref, pe_ref, o_ref):
    # Works for both layouts: flat path broadcasts the (1, tn) PE tile over the batch
    # sublanes; row path adds same-shaped (tile_rows, d_model) tiles.
    o_ref[...] = x_ref[...] + pe_ref[...]


def _choose_row_tile(seq_len, d_model, itemsize, sublane):
    """Largest tile_rows that divides seq_len, is a multiple of the sublane count and
    keeps one (tile_rows, d_model) block <= _TARGET_BLOCK_BYTES.  None if impossible."""
    if d_model % _LANE != 0 or seq_len % sublane != 0:
        return None
    rows_cap = max(sublane, (_TARGET_BLOCK_BYTES // (d_model * itemsize)) // sublane * sublane)
    t = (min(rows_cap, seq_len) // sublane) * sublane
    while t >= sublane:
        if seq_len % t == 0:
            return t
        t -= sublane
    return None


def _forward_rows(x, pe_table, tile_rows):
    """Row-tiled path: zero sublane padding, lane-dense because d_model % 128 == 0."""
    batch, seq_len, d_model = x.shape
    itemsize = jnp.dtype(x.dtype).itemsize
    tiles_per_seq = seq_len // tile_rows

    def x_map(t, b):
        return (b, t, 0)

    def pe_map(t, b):
        # Constant across the inner (sequential) batch axis -> PE block DMA'd once per t.
        return (t, 0)

    blk_bytes = tile_rows * d_model * itemsize
    return pl.pallas_call(
        _add_pe_kernel,
        out_shape=jax.ShapeDtypeStruct((batch, seq_len, d_model), x.dtype),
        grid_spec=pltpu.PrefetchScalarGridSpec(
            num_scalar_prefetch=0,
            grid=(tiles_per_seq, batch),
            in_specs=[
                pl.BlockSpec((None, tile_rows, d_model), x_map),
                pl.BlockSpec((tile_rows, d_model), pe_map),
            ],
            out_specs=pl.BlockSpec((None, tile_rows, d_model), x_map),
        ),
        compiler_params=pltpu.CompilerParams(
            dimension_semantics=("parallel", "arbitrary"),
            vmem_limit_bytes=_vmem_limit(2 * 3 * blk_bytes),
        ),
    )(x, pe_table)


def _forward_flat(x, pe_flat):
    """Lane-dense flattened path: x2=(batch, seq*d), pe_flat=(1, max_len*d)."""
    batch, seq_len, d_model = x.shape
    n = seq_len * d_model
    itemsize = jnp.dtype(x.dtype).itemsize
    sub = _sublanes(itemsize)
    pad_b = _round_up(batch, sub)  # VMEM sublane padding of a (batch, tn) block

    x2 = x.reshape(batch, n)

    # tn sized against the *padded* footprint so a block is ~_TARGET_BLOCK_BYTES in VMEM.
    tn = max(_LANE, (_TARGET_BLOCK_BYTES // (pad_b * itemsize)) // _LANE * _LANE)
    pe_arr = pe_flat
    if tn >= n:
        tn = n  # tiny problem: single full-array block
    num_tiles = _cdiv(n, tn)

    # v7x has 2 TensorCores: give the parallel grid >=2 tiles for non-trivial problems.
    if num_tiles == 1 and n > _LANE and batch * n * itemsize >= (1 << 20):
        tn = _round_up(_cdiv(n, 2), _LANE)
        num_tiles = _cdiv(n, tn)

    if num_tiles == 1 and n % _LANE != 0:
        # Single tile whose lane width is not a multiple of 128: the PE block must equal
        # the full PE array dims, so take a (tiny, one-off) slice of the cached table.
        pe_arr = pe_flat[:, :n]

    x_blk = pad_b * tn * itemsize          # padded VMEM bytes of one x / out block
    pe_blk = sub * tn * itemsize           # (1, tn) block padded to `sub` sublanes
    out2 = pl.pallas_call(
        _add_pe_kernel,
        out_shape=jax.ShapeDtypeStruct((batch, n), x.dtype),
        grid_spec=pltpu.PrefetchScalarGridSpec(
            num_scalar_prefetch=0,
            grid=(num_tiles,),
            in_specs=[
                pl.BlockSpec((batch, tn), lambda i: (0, i)),
                pl.BlockSpec((1, tn), lambda i: (0, i)),
            ],
            out_specs=pl.BlockSpec((batch, tn), lambda i: (0, i)),
        ),
        compiler_params=pltpu.CompilerParams(
            dimension_semantics=("parallel",),
            vmem_limit_bytes=_vmem_limit(2 * (2 * x_blk + pe_blk)),
        ),
    )(x2, pe_arr)
    return out2.reshape(batch, seq_len, d_model)


def positional_encoding_forward(x, pe_table, pe_flat=None):
    """x: (batch, seq_len, d_model); pe_table: (max_len, d_model) (ideally already x.dtype)."""
    batch, seq_len, d_model = x.shape
    max_len, pe_d = pe_table.shape
    if seq_len > max_len:
        raise ValueError(f"seq_len={seq_len} exceeds positional-encoding max_len={max_len}")
    if pe_d != d_model:
        raise ValueError(f"d_model mismatch: x has {d_model}, pe table has {pe_d}")
    if pe_table.dtype != x.dtype:
        pe_table = pe_table.astype(x.dtype)
        pe_flat = None

    itemsize = jnp.dtype(x.dtype).itemsize
    sub = _sublanes(itemsize)

    if batch < sub:
        tile_rows = _choose_row_tile(seq_len, d_model, itemsize, sub)
        if tile_rows is not None:
            return _forward_rows(x, pe_table, tile_rows)

    if pe_flat is None:
        pe_flat = pe_table.reshape(1, max_len * d_model)
    return _forward_flat(x, pe_flat)


class PositionalEncoding:
    """Mirror of the PyTorch module: builds the PE table once, adds it in forward()."""

    def __init__(self, d_model: int, max_len: int = 5000):
        self.d_model = d_model
        self.max_len = max_len
        self.pe = make_positional_encoding(d_model, max_len)   # (max_len, d_model) f32
        self._cache = {}  # dtype name -> (pe_cast, pe_cast_flat)

    def _tables(self, dtype):
        key = jnp.dtype(dtype).name
        if key not in self._cache:
            pe = self.pe.astype(dtype)
            self._cache[key] = (pe, pe.reshape(1, self.max_len * self.d_model))
        return self._cache[key]

    def __call__(self, x):
        pe, pe_flat = self._tables(x.dtype)
        return positional_encoding_forward(x, pe, pe_flat)


if __name__ == "__main__":
    # Case 1: small d_model (not a multiple of 128) -> lane-dense flattened path.
    batch, seq_len, d_model, max_len = 2, 8, 32, 64
    x1 = jax.random.normal(jax.random.PRNGKey(0), (batch, seq_len, d_model), dtype=jnp.float32)
    mod1 = PositionalEncoding(d_model, max_len)
    out1 = jax.block_until_ready(mod1(x1))
    ref1 = x1 + mod1.pe[None, :seq_len, :]
    assert out1.shape == (batch, seq_len, d_model)
    assert jnp.allclose(out1, ref1, atol=1e-6, rtol=1e-6)

    # Case 2: d_model % 128 == 0, small batch -> row-tiled path (no sublane padding);
    # also exercised under jit (path selection / reshapes are trace-time static & free).
    batch, seq_len, d_model, max_len = 2, 16, 128, 64
    x2 = jax.random.normal(jax.random.PRNGKey(0), (batch, seq_len, d_model), dtype=jnp.float32)
    mod2 = PositionalEncoding(d_model, max_len)
    out2 = jax.block_until_ready(jax.jit(mod2.__call__)(x2))
    ref2 = x2 + mod2.pe[None, :seq_len, :]
    assert out2.shape == (batch, seq_len, d_model)
    assert jnp.allclose(out2, ref2, atol=1e-6, rtol=1e-6)

    print("KERNEL_OK")
</pallas_src>

<mosaic_0001>
module attributes {stable_mosaic.version = 11 : i64} {
  func.func @_add_pe_kernel(%arg0: i32, %arg1: memref<2x256xf32, #tpu.memory_space<vmem>>, %arg2: memref<1x256xf32, #tpu.memory_space<vmem>>, %arg3: memref<2x256xf32, #tpu.memory_space<vmem>>) attributes {dimension_semantics = [#tpu.dimension_semantics<parallel>], iteration_bounds = array<i64: 1>, scalar_prefetch = 0 : i64, scratch_operands = 0 : i64, tpu.core_type = #tpu.core_type<tc>, window_params = [{transform_indices = @transform_0, window_bounds = array<i64: 2, 256>}, {transform_indices = @transform_1, window_bounds = array<i64: 1, 256>}, {transform_indices = @transform_2, window_bounds = array<i64: 2, 256>}]} {
    %c0 = arith.constant 0 : index
    %c0_0 = arith.constant 0 : index
    %0 = vector.load %arg1[%c0, %c0_0] : memref<2x256xf32, #tpu.memory_space<vmem>>, vector<2x256xf32>
    %c0_1 = arith.constant 0 : index
    %c0_2 = arith.constant 0 : index
    %1 = vector.load %arg2[%c0_1, %c0_2] : memref<1x256xf32, #tpu.memory_space<vmem>>, vector<1x256xf32>
    %2 = vector.broadcast %1 : vector<1x256xf32> to vector<2x256xf32>
    %3 = arith.addf %0, %2 : vector<2x256xf32>
    %c0_3 = arith.constant 0 : index
    %c0_4 = arith.constant 0 : index
    %4 = vector.load %arg3[%c0_3, %c0_4] : memref<2x256xf32, #tpu.memory_space<vmem>>, vector<2x256xf32>
    tpu.vector_store %arg3[%c0_3, %c0_4], %3 {strides = array<i32>} : memref<2x256xf32, #tpu.memory_space<vmem>>, vector<2x256xf32>,
    return
  }
  func.func @transform_0(%arg0: i32) -> (i32, i32) {
    %c0_i32 = arith.constant 0 : i32
    %c0_i32_0 = arith.constant 0 : i32
    return %c0_i32, %arg0 : i32, i32
  }
  func.func @transform_1(%arg0: i32) -> (i32, i32) {
    %c0_i32 = arith.constant 0 : i32
    %c0_i32_0 = arith.constant 0 : i32
    return %c0_i32, %arg0 : i32, i32
  }
  func.func @transform_2(%arg0: i32) -> (i32, i32) {
    %c0_i32 = arith.constant 0 : i32
    %c0_i32_0 = arith.constant 0 : i32
    return %c0_i32, %arg0 : i32, i32
  }
}

</mosaic_0001>

<llo_original>
// kernel: tpu_custom_call.1
$region0: #{tpu_custom_call.1}
  #allocation0 [shape = 'u32[]', space=smem, size = 0x4, offset = 0x4, fixed_abs, tag = 'smem constant byte address 0x4 - core index']
  #allocation1 [shape = 'u32[144,128]{1,0:T(1,128)}', space=vmem, size = 0x12000, scoped, tag = 'internal scratch']
  %s0 = inlined_call_operand.hbm [shape: f32[2,256], index: 0, kind: input, shape index: {}]
  %s1 = inlined_call_operand.hbm [shape: f32[1,2048], index: 1, kind: input, shape index: {}]
  %s2 = inlined_call_operand.hbm [shape: f32[2,256], index: 2, kind: output, shape index: {}]
  %s3 = sld [smem:[#allocation0]]
  $region26: #{tpu_custom_call.1} parent=0
    _
  %s5 = ssub.s32 1, %s3
  %s6 = scalar_select 0, %s5, %s3
  $region1: #{tpu_custom_call.1} parent=0
    #allocation2 [shape = 'u8[2048]{0}', space=vmem, size = 0x800, scoped, tag = 'input window, operand 0, single buffered']
    #allocation3 [shape = 's32[1]{0}', space=sflag, size = 0x4, scoped, tag = 'scoped memory for tpu_custom_call.1']
    #allocation4 [shape = 's32[1]{0}', space=sflag, size = 0x4, scoped, tag = 'scoped memory for tpu_custom_call.1']
    #allocation5 [shape = 'u8[1024]{0}', space=vmem, size = 0x400, scoped, tag = 'input window, operand 1, single buffered']
    #allocation6 [shape = 's32[1]{0}', space=sflag, size = 0x4, scoped, tag = 'scoped memory for tpu_custom_call.1']
    #allocation7 [shape = 'u8[2048]{0}', space=vmem, size = 0x800, scoped, tag = 'output window, operand 0, single buffered']
    %7 = vsyncpa [#allocation3], 0
    %8 = vsyncpa [#allocation6], 0
    %9 = vsyncpa [#allocation4], 0
    // Predicated region
    $region2: #{tpu_custom_call.1} parent=1 // pred_check
      _
    $region3: #{tpu_custom_call.1} parent=1 // pred_check_branch
      %11 = sbr.rel (0) target = $region5
    $region4: #{tpu_custom_call.1} parent=1 // pred_region
      %s13 = ssub.s32 64, 64
      %14 = vsyncadd [#allocation3], %s13
      %s16 = sshll.u32 [#allocation2], 4
      %s17 = int_to_ptr.vmem [resolvable:$true] %s16
      %19 = dma.hbm_to_vmem [thread:$0]  %s0, 64, %s17, [#allocation3]
    $region5: #{tpu_custom_call.1} parent=1 // pred_fallthru
      _
    // Predicated region
    $region6: #{tpu_custom_call.1} parent=1 // pred_check
      _
    $region7: #{tpu_custom_call.1} parent=1 // pred_check_branch
      %21 = sbr.rel (0) target = $region9
    $region8: #{tpu_custom_call.1} parent=1 // pred_region
      %s23 = ssub.s32 32, 32
      %24 = vsyncadd [#allocation6], %s23
      %s26 = sshll.u32 [#allocation5], 4
      %s27 = int_to_ptr.vmem [resolvable:$true] %s26
      %29 = dma.hbm_to_vmem [thread:$0]  %s1, 32, %s27, [#allocation6]
    $region9: #{tpu_custom_call.1} parent=1 // pred_fallthru
      _
    // Predicated region
    $region10: #{tpu_custom_call.1} parent=1 // pred_check
      _
    $region11: #{tpu_custom_call.1} parent=1 // pred_check_branch
      %31 = sbr.rel (0) target = $region13
    $region12: #{tpu_custom_call.1} parent=1 // pred_region
      %32 = dma.done [#allocation3], 64
    $region13: #{tpu_custom_call.1} parent=1 // pred_fallthru
      _
    // Predicated region
    $region14: #{tpu_custom_call.1} parent=1 // pred_check
      _
    $region15: #{tpu_custom_call.1} parent=1 // pred_check_branch
      %34 = sbr.rel (0) target = $region17
    $region16: #{tpu_custom_call.1} parent=1 // pred_region
      %35 = dma.done [#allocation6], 32
    $region17: #{tpu_custom_call.1} parent=1 // pred_fallthru
      _
    %v36 = vld [vmem:[#allocation2] sm:$0xf]
    %v37 = vld [vmem:[#allocation5] sm:$0x3]
    %v39 = vlaneseq
    %v40 = vshrl.u32 %v39, 7
    %v41 = vsub.s32 0, %v40
    %v42 = vrot.slane %v37, %v41
    %v43 = vlaneseq
    %v44 = vshrl.u32 %v43, 7
    %v45 = vsub.s32 1, %v44
    %v46 = vrot.slane %v37, %v45
    %v47 = vcombine.low %v42, %v46
    %v49 = vunpack.c.l.s4 1983009808
    %v50 = vunpack.c.0.s8 %v49
    %v51 = vlaneseq
    %v52 = vshrl.u32 %v51, 7
    %v53 = vsub.s32 %v50, %v52
    %v54 = vrot.slane %v47, %v53
    %v56 = vadd.f32 %v36, %v54
    %57 = vst [vmem:[#allocation7] sm:$0xf] %v56
    // Predicated region
    $region18: #{tpu_custom_call.1} parent=1 // pred_check
      _
    $region19: #{tpu_custom_call.1} parent=1 // pred_check_branch
      %59 = sbr.rel (0) target = $region21
    $region20: #{tpu_custom_call.1} parent=1 // pred_region
      %s61 = ssub.s32 64, 64
      %62 = vsyncadd [#allocation4], %s61
      %s64 = sshll.u32 [#allocation7], 4
      %s65 = int_to_ptr.vmem [resolvable:$true] %s64
      %67 = dma.vmem_to_hbm [thread:$0]  %s65, 64, %s2, [#allocation4]
    $region21: #{tpu_custom_call.1} parent=1 // pred_fallthru
      _
    // Predicated region
    $region22: #{tpu_custom_call.1} parent=1 // pred_check
      _
    $region23: #{tpu_custom_call.1} parent=1 // pred_check_branch
      %69 = sbr.rel (0) target = $region25
    $region24: #{tpu_custom_call.1} parent=1 // pred_region
      %70 = dma.done [#allocation4], 64
    $region25: #{tpu_custom_call.1} parent=1 // pred_fallthru
      _
    %71 = vsyncpa [#allocation3], 1
    %72 = vsyncpa [#allocation6], 1
    %73 = vsyncpa [#allocation4], 1

</llo_original>
